<compile_context>
chip_gen: v7x
topology: tpu7x:2x2x1
jax: 0.10.0
libtpu: 0.0.40
codegen_flags: <defaults>
</compile_context>

<pallas_src>
import functools

import jax
import jax.numpy as jnp
from jax.experimental import pallas as pl
from jax.experimental.pallas import tpu as pltpu


# ---------------------------------------------------------------------------
# Kernel
# ---------------------------------------------------------------------------
def mean_pooler_kernel(x_ref, wt_ref, b_ref, o_ref, acc_ref, *,
                       inv_seq_len, seq_len, s_tile, seq_has_tail):
    # x_ref:  (B_tile, S_tile, H) VMEM tile of hidden_states
    # wt_ref: (H, H)  pre-transposed weight ([in, out]); resident across seq
    # b_ref:  (1, H)  bias; resident across seq
    # o_ref:  (B_tile, H) output tile
    # acc_ref:(B_tile, H) f32 accumulator scratch (persists across seq steps)
    s = pl.program_id(1)

    @pl.when(s == 0)
    def _init():
        acc_ref[...] = jnp.zeros_like(acc_ref)

    x = x_ref[...]
    if seq_has_tail:
        # cdiv grid: last seq tile may extend past S — zero out-of-bounds rows
        # before they hit the accumulator (OOB reads are undefined).
        row = jax.lax.broadcasted_iota(jnp.int32, (1, s_tile, 1), 1) + s * s_tile
        x = jnp.where(row < seq_len, x, 0)

    # Sum this sequence tile in f32 without materializing a full f32 copy.
    acc_ref[...] += jnp.sum(x, axis=1, dtype=jnp.float32)

    @pl.when(s == pl.num_programs(1) - 1)
    def _finalize():
        # mean = sum * (1/S); cast to weight dtype so the MXU runs native.
        pooled = (acc_ref[...] * inv_seq_len).astype(wt_ref.dtype)
        y = jnp.dot(pooled, wt_ref[...], preferred_element_type=jnp.float32)
        y = y + b_ref[...].astype(jnp.float32)
        o_ref[...] = jnp.tanh(y).astype(o_ref.dtype)


# ---------------------------------------------------------------------------
# Tiling / budgeting helpers
# ---------------------------------------------------------------------------
def _round_up(x, m):
    return ((x + m - 1) // m) * m


def _sublane_unit(dtype):
    # Packed-row alignment for the second-minor axis: 8 (f32), 16 (bf16),
    # 32 (int8 / fp8).
    return max(8, 32 // jnp.dtype(dtype).itemsize)


def _pick_tile(dim, target, unit):
    """Full extent if the axis fits the target; otherwise the largest multiple
    of `unit` <= target.  Non-dividing tiles are handled with a cdiv grid and
    in-kernel masking — never by blowing the whole axis into one VMEM block."""
    if dim <= target:
        return dim
    return max(unit, (target // unit) * unit)


def _vmem_capacity_bytes():
    try:
        info = pltpu.get_tpu_info()
        for attr in ("vmem_capacity_bytes", "vmem_bytes", "vmem_size_bytes"):
            v = getattr(info, attr, None)
            if v:
                return int(v)
    except Exception:
        pass
    return 64 << 20  # conservative fallback: smallest per-core VMEM (v7x-class)


# ---------------------------------------------------------------------------
# Wrapper
# ---------------------------------------------------------------------------
def mean_pooler(hidden_states, weight_t, bias, *, block_budget_bytes=None):
    """hidden_states: [B, S, H]; weight_t: [H_in, H_out] (Linear weight, stored
    pre-transposed outside the hot path); bias: [H].  Returns [B, H]."""
    B, S, H = hidden_states.shape
    dtype = hidden_states.dtype
    itemsize = jnp.dtype(dtype).itemsize

    # --- per-generation budgets ---------------------------------------------
    vmem_cap = _vmem_capacity_bytes()
    small_vmem = vmem_cap < (100 << 20)        # v7x-class: 64 MiB/TC, 2 TCs/chip
    block_budget = (6 << 20) if small_vmem else (16 << 20)
    if block_budget_bytes is not None:
        block_budget = int(block_budget_bytes)
    limit_cap = (38 << 20) if small_vmem else (80 << 20)

    # --- tile selection -------------------------------------------------------
    unit_b = _sublane_unit(dtype)
    unit_s = unit_b

    b_target = 128
    if small_vmem and B >= 2 * unit_b:
        # Megacore: guarantee >=2 programs on the "parallel" batch axis so both
        # TensorCores' DMA engines stream this HBM-bound kernel.
        b_target = min(b_target, _round_up(pl.cdiv(B, 2), unit_b))
    b_tile = _pick_tile(B, b_target, unit_b)

    s_target = max(unit_s, block_budget // max(1, b_tile * H * itemsize))
    s_tile = _pick_tile(S, s_target, unit_s)
    seq_has_tail = (S % s_tile) != 0

    grid = (pl.cdiv(B, b_tile), pl.cdiv(S, s_tile))
    bias2d = bias.reshape(1, H)

    # --- VMEM accounting ------------------------------------------------------
    in_block = b_tile * s_tile * H * itemsize
    w_bytes = H * H * jnp.dtype(weight_t.dtype).itemsize
    bias_bytes = H * jnp.dtype(bias.dtype).itemsize
    out_block = b_tile * H * itemsize
    acc_bytes = b_tile * H * 4

    kernel = functools.partial(
        mean_pooler_kernel,
        inv_seq_len=1.0 / S, seq_len=S, s_tile=s_tile, seq_has_tail=seq_has_tail)

    cost = pl.CostEstimate(
        flops=int(B * S * H + 2 * B * H * H),
        transcendentals=int(B * H),
        bytes_accessed=int(B * S * H * itemsize + w_bytes + bias_bytes
                           + B * H * itemsize),
    )

    def build(const_pipeline_mode):
        spec_kw = ({} if const_pipeline_mode is None
                   else dict(pipeline_mode=const_pipeline_mode))
        n_const_buf = 1 if const_pipeline_mode is not None else 2
        vmem_need = (2 * in_block + n_const_buf * (w_bytes + bias_bytes)
                     + 2 * out_block + acc_bytes)
        vmem_limit = int(min(limit_cap, max(vmem_need + (8 << 20), 16 << 20)))
        return pl.pallas_call(
            kernel,
            out_shape=jax.ShapeDtypeStruct((B, H), dtype),
            grid_spec=pltpu.PrefetchScalarGridSpec(
                num_scalar_prefetch=0,
                grid=grid,
                in_specs=[
                    pl.BlockSpec((b_tile, s_tile, H), lambda b, s: (b, s, 0)),
                    # Constant across the whole grid: DMA'd once, kept resident.
                    pl.BlockSpec((H, H), lambda b, s: (0, 0), **spec_kw),
                    pl.BlockSpec((1, H), lambda b, s: (0, 0), **spec_kw),
                ],
                out_specs=pl.BlockSpec((b_tile, H), lambda b, s: (b, 0)),
                scratch_shapes=[pltpu.VMEM((b_tile, H), jnp.float32)],
            ),
            compiler_params=pltpu.CompilerParams(
                dimension_semantics=("parallel", "arbitrary"),
                vmem_limit_bytes=vmem_limit,
            ),
            cost_estimate=cost,
        )

    try:
        # Single-buffer the constant weight/bias (they never change across the
        # grid); reclaimed VMEM goes into the input-tile budget.
        out = build(pl.Buffered(1))(hidden_states, weight_t, bias2d)
        return jax.block_until_ready(out)
    except Exception:
        # pipeline_mode=Buffered(1) unsupported on this JAX version — fall back
        # to default double-buffering (identical numerics, slightly more VMEM).
        out = build(None)(hidden_states, weight_t, bias2d)
        return jax.block_until_ready(out)


# ---------------------------------------------------------------------------
# Reference + self-test
# ---------------------------------------------------------------------------
def mean_pooler_ref(hidden_states, weight, bias):
    pooled = jnp.mean(hidden_states.astype(jnp.float32), axis=1)
    y = pooled @ weight.astype(jnp.float32).T + bias.astype(jnp.float32)
    return jnp.tanh(y).astype(hidden_states.dtype)


if __name__ == "__main__":
    H = 32
    key = jax.random.PRNGKey(0)
    k_x, k_w, k_b, k_x2 = jax.random.split(key, 4)

    # Deterministic synthetic Linear(hidden_size, hidden_size) params.
    weight = jax.random.normal(k_w, (H, H), dtype=jnp.float32) * (1.0 / H ** 0.5)
    bias = jax.random.normal(k_b, (H,), dtype=jnp.float32) * 0.01
    # Hoisted layout plumbing: weight stored pre-transposed ([H_in, H_out]) so
    # the hot path never pays an H^2 transpose.
    weight_t = jnp.asarray(weight.T)

    # 1) Small canonical shape (single seq tile).
    B, S = 2, 8
    hidden_states = jax.random.normal(k_x, (B, S, H), dtype=jnp.float32)
    out = jax.block_until_ready(mean_pooler(hidden_states, weight_t, bias))
    ref = mean_pooler_ref(hidden_states, weight, bias)
    assert out.shape == (B, H)
    assert jnp.allclose(out, ref, atol=1e-5, rtol=1e-5), "mismatch vs reference"

    # 2) Exercise the cdiv grid + masked seq-tail path (tiny block budget forces
    #    s_tile=8 over S=12 -> partial last tile).
    B2, S2 = 2, 12
    hs2 = jax.random.normal(k_x2, (B2, S2, H), dtype=jnp.float32)
    out2 = jax.block_until_ready(
        mean_pooler(hs2, weight_t, bias, block_budget_bytes=2048))
    ref2 = mean_pooler_ref(hs2, weight, bias)
    assert out2.shape == (B2, H)
    assert jnp.allclose(out2, ref2, atol=1e-5, rtol=1e-5), "tail-mask mismatch"

    print("KERNEL_OK")
</pallas_src>

<mosaic_0001>
module attributes {stable_mosaic.version = 11 : i64} {
  func.func @mean_pooler_kernel(%arg0: i32, %arg1: i32, %arg2: memref<2x8x32xf32, #tpu.memory_space<vmem>>, %arg3: memref<32x32xf32, #tpu.memory_space<vmem>>, %arg4: memref<1x32xf32, #tpu.memory_space<vmem>>, %arg5: memref<2x32xf32, #tpu.memory_space<vmem>>, %arg6: memref<2x32xf32, #tpu.memory_space<vmem>>) attributes {dimension_semantics = [#tpu.dimension_semantics<parallel>, #tpu.dimension_semantics<arbitrary>], iteration_bounds = array<i64: 1, 1>, scalar_prefetch = 0 : i64, scratch_operands = 1 : i64, tpu.core_type = #tpu.core_type<tc>, window_params = [{transform_indices = @transform_0, window_bounds = array<i64: 2, 8, 32>}, {pipeline_mode = #tpu.pipeline_mode<synchronous>, transform_indices = @transform_1, window_bounds = array<i64: 32, 32>}, {pipeline_mode = #tpu.pipeline_mode<synchronous>, transform_indices = @transform_2, window_bounds = array<i64: 1, 32>}, {transform_indices = @transform_3, window_bounds = array<i64: 2, 32>}]} {
    %c0_i32 = arith.constant 0 : i32
    %0 = arith.cmpi eq, %arg1, %c0_i32 : i32
    %1 = arith.extui %0 : i1 to i32
    %c0_i32_0 = arith.constant 0 : i32
    %2 = arith.cmpi ne, %1, %c0_i32_0 : i32
    scf.if %2 {
      %cst_9 = arith.constant 0.000000e+00 : f32
      %11 = vector.broadcast %cst_9 : f32 to vector<2x32xf32>
      %c0_10 = arith.constant 0 : index
      %c0_11 = arith.constant 0 : index
      %12 = vector.load %arg6[%c0_10, %c0_11] : memref<2x32xf32, #tpu.memory_space<vmem>>, vector<2x32xf32>
      tpu.vector_store %arg6[%c0_10, %c0_11], %11 {strides = array<i32>} : memref<2x32xf32, #tpu.memory_space<vmem>>, vector<2x32xf32>,
    } else {
    }
    %c0 = arith.constant 0 : index
    %c0_1 = arith.constant 0 : index
    %c0_2 = arith.constant 0 : index
    %3 = vector.load %arg2[%c0, %c0_1, %c0_2] : memref<2x8x32xf32, #tpu.memory_space<vmem>>, vector<2x8x32xf32>
    %c0_3 = arith.constant 0 : index
    %c0_4 = arith.constant 0 : index
    %4 = vector.load %arg6[%c0_3, %c0_4] : memref<2x32xf32, #tpu.memory_space<vmem>>, vector<2x32xf32>
    %cst = arith.constant dense<0.000000e+00> : vector<2x32xf32>
    %5 = vector.multi_reduction <add>, %3, %cst [1] : vector<2x8x32xf32> to vector<2x32xf32>
    %6 = arith.addf %4, %5 : vector<2x32xf32>
    %c0_5 = arith.constant 0 : index
    %c0_6 = arith.constant 0 : index
    %7 = vector.load %arg6[%c0_5, %c0_6] : memref<2x32xf32, #tpu.memory_space<vmem>>, vector<2x32xf32>
    tpu.vector_store %arg6[%c0_5, %c0_6], %6 {strides = array<i32>} : memref<2x32xf32, #tpu.memory_space<vmem>>, vector<2x32xf32>,
    %c0_i32_7 = arith.constant 0 : i32
    %8 = arith.cmpi eq, %arg1, %c0_i32_7 : i32
    %9 = arith.extui %8 : i1 to i32
    %c0_i32_8 = arith.constant 0 : i32
    %10 = arith.cmpi ne, %9, %c0_i32_8 : i32
    scf.if %10 {
      %c0_9 = arith.constant 0 : index
      %c0_10 = arith.constant 0 : index
      %11 = vector.load %arg6[%c0_9, %c0_10] : memref<2x32xf32, #tpu.memory_space<vmem>>, vector<2x32xf32>
      %cst_11 = arith.constant 1.250000e-01 : f32
      %12 = vector.broadcast %cst_11 : f32 to vector<2x32xf32>
      %13 = arith.mulf %11, %12 : vector<2x32xf32>
      %c0_12 = arith.constant 0 : index
      %c0_13 = arith.constant 0 : index
      %14 = vector.load %arg3[%c0_12, %c0_13] : memref<32x32xf32, #tpu.memory_space<vmem>>, vector<32x32xf32>
      %cst_14 = arith.constant dense<0.000000e+00> : vector<2x32xf32>
      %15 = tpu.matmul %13, %14, %cst_14 {dimension_numbers = #tpu.dot_dimension_numbers<[1], [0], [0], [1], [0, 0, 1, 1], [], []>} : vector<2x32xf32>, vector<32x32xf32>, vector<2x32xf32> -> vector<2x32xf32>
      %c0_15 = arith.constant 0 : index
      %c0_16 = arith.constant 0 : index
      %16 = vector.load %arg4[%c0_15, %c0_16] : memref<1x32xf32, #tpu.memory_space<vmem>>, vector<1x32xf32>
      %17 = vector.broadcast %16 : vector<1x32xf32> to vector<2x32xf32>
      %18 = arith.addf %15, %17 : vector<2x32xf32>
      %19 = math.tanh %18 : vector<2x32xf32>
      %c0_17 = arith.constant 0 : index
      %c0_18 = arith.constant 0 : index
      %20 = vector.load %arg5[%c0_17, %c0_18] : memref<2x32xf32, #tpu.memory_space<vmem>>, vector<2x32xf32>
      tpu.vector_store %arg5[%c0_17, %c0_18], %19 {strides = array<i32>} : memref<2x32xf32, #tpu.memory_space<vmem>>, vector<2x32xf32>,
    } else {
    }
    return
  }
  func.func @transform_0(%arg0: i32, %arg1: i32) -> (i32, i32, i32) {
    %c0_i32 = arith.constant 0 : i32
    %c0_i32_0 = arith.constant 0 : i32
    return %arg0, %arg1, %c0_i32 : i32, i32, i32
  }
  func.func @transform_1(%arg0: i32, %arg1: i32) -> (i32, i32) {
    %c0_i32 = arith.constant 0 : i32
    %c0_i32_0 = arith.constant 0 : i32
    %c0_i32_1 = arith.constant 0 : i32
    return %c0_i32, %c0_i32_0 : i32, i32
  }
  func.func @transform_2(%arg0: i32, %arg1: i32) -> (i32, i32) {
    %c0_i32 = arith.constant 0 : i32
    %c0_i32_0 = arith.constant 0 : i32
    %c0_i32_1 = arith.constant 0 : i32
    return %c0_i32, %c0_i32_0 : i32, i32
  }
  func.func @transform_3(%arg0: i32, %arg1: i32) -> (i32, i32) {
    %c0_i32 = arith.constant 0 : i32
    %c0_i32_0 = arith.constant 0 : i32
    return %arg0, %c0_i32 : i32, i32
  }
}

module attributes {stable_mosaic.version = 11 : i64} {
  func.func @mean_pooler_kernel(%arg0: i32, %arg1: i32, %arg2: memref<2x8x32xf32, #tpu.memory_space<vmem>>, %arg3: memref<32x32xf32, #tpu.memory_space<vmem>>, %arg4: memref<1x32xf32, #tpu.memory_space<vmem>>, %arg5: memref<2x32xf32, #tpu.memory_space<vmem>>, %arg6: memref<2x32xf32, #tpu.memory_space<vmem>>) attributes {dimension_semantics = [#tpu.dimension_semantics<parallel>, #tpu.dimension_semantics<arbitrary>], iteration_bounds = array<i64: 1, 1>, scalar_prefetch = 0 : i64, scratch_operands = 1 : i64, tpu.core_type = #tpu.core_type<tc>, window_params = [{transform_indices = @transform_0, window_bounds = array<i64: 2, 8, 32>}, {pipeline_mode = #tpu.pipeline_mode<synchronous>, transform_indices = @transform_1, window_bounds = array<i64: 32, 32>}, {pipeline_mode = #tpu.pipeline_mode<synchronous>, transform_indices = @transform_2, window_bounds = array<i64: 1, 32>}, {transform_indices = @transform_3, window_bounds = array<i64: 2, 32>}]} {
    %c0_i32 = arith.constant 0 : i32
    %0 = arith.cmpi eq, %arg1, %c0_i32 : i32
    %1 = arith.extui %0 : i1 to i32
    %c0_i32_0 = arith.constant 0 : i32
    %2 = arith.cmpi ne, %1, %c0_i32_0 : i32
    scf.if %2 {
      %cst_9 = arith.constant 0.000000e+00 : f32
      %11 = vector.broadcast %cst_9 : f32 to vector<2x32xf32>
      %c0_10 = arith.constant 0 : index
      %c0_11 = arith.constant 0 : index
      %12 = vector.load %arg6[%c0_10, %c0_11] : memref<2x32xf32, #tpu.memory_space<vmem>>, vector<2x32xf32>
      tpu.vector_store %arg6[%c0_10, %c0_11], %11 {strides = array<i32>} : memref<2x32xf32, #tpu.memory_space<vmem>>, vector<2x32xf32>,
    } else {
    }
    %c0 = arith.constant 0 : index
    %c0_1 = arith.constant 0 : index
    %c0_2 = arith.constant 0 : index
    %3 = vector.load %arg2[%c0, %c0_1, %c0_2] : memref<2x8x32xf32, #tpu.memory_space<vmem>>, vector<2x8x32xf32>
    %c0_3 = arith.constant 0 : index
    %c0_4 = arith.constant 0 : index
    %4 = vector.load %arg6[%c0_3, %c0_4] : memref<2x32xf32, #tpu.memory_space<vmem>>, vector<2x32xf32>
    %cst = arith.constant dense<0.000000e+00> : vector<2x32xf32>
    %5 = vector.multi_reduction <add>, %3, %cst [1] : vector<2x8x32xf32> to vector<2x32xf32>
    %6 = arith.addf %4, %5 : vector<2x32xf32>
    %c0_5 = arith.constant 0 : index
    %c0_6 = arith.constant 0 : index
    %7 = vector.load %arg6[%c0_5, %c0_6] : memref<2x32xf32, #tpu.memory_space<vmem>>, vector<2x32xf32>
    tpu.vector_store %arg6[%c0_5, %c0_6], %6 {strides = array<i32>} : memref<2x32xf32, #tpu.memory_space<vmem>>, vector<2x32xf32>,
    %c0_i32_7 = arith.constant 0 : i32
    %8 = arith.cmpi eq, %arg1, %c0_i32_7 : i32
    %9 = arith.extui %8 : i1 to i32
    %c0_i32_8 = arith.constant 0 : i32
    %10 = arith.cmpi ne, %9, %c0_i32_8 : i32
    scf.if %10 {
      %c0_9 = arith.constant 0 : index
      %c0_10 = arith.constant 0 : index
      %11 = vector.load %arg6[%c0_9, %c0_10] : memref<2x32xf32, #tpu.memory_space<vmem>>, vector<2x32xf32>
      %cst_11 = arith.constant 1.250000e-01 : f32
      %12 = vector.broadcast %cst_11 : f32 to vector<2x32xf32>
      %13 = arith.mulf %11, %12 : vector<2x32xf32>
      %c0_12 = arith.constant 0 : index
      %c0_13 = arith.constant 0 : index
      %14 = vector.load %arg3[%c0_12, %c0_13] : memref<32x32xf32, #tpu.memory_space<vmem>>, vector<32x32xf32>
      %cst_14 = arith.constant dense<0.000000e+00> : vector<2x32xf32>
      %15 = tpu.matmul %13, %14, %cst_14 {dimension_numbers = #tpu.dot_dimension_numbers<[1], [0], [0], [1], [0, 0, 1, 1], [], []>} : vector<2x32xf32>, vector<32x32xf32>, vector<2x32xf32> -> vector<2x32xf32>
      %c0_15 = arith.constant 0 : index
      %c0_16 = arith.constant 0 : index
      %16 = vector.load %arg4[%c0_15, %c0_16] : memref<1x32xf32, #tpu.memory_space<vmem>>, vector<1x32xf32>
      %17 = vector.broadcast %16 : vector<1x32xf32> to vector<2x32xf32>
      %18 = arith.addf %15, %17 : vector<2x32xf32>
      %19 = math.tanh %18 : vector<2x32xf32>
      %c0_17 = arith.constant 0 : index
      %c0_18 = arith.constant 0 : index
      %20 = vector.load %arg5[%c0_17, %c0_18] : memref<2x32xf32, #tpu.memory_space<vmem>>, vector<2x32xf32>
      tpu.vector_store %arg5[%c0_17, %c0_18], %19 {strides = array<i32>} : memref<2x32xf32, #tpu.memory_space<vmem>>, vector<2x32xf32>,
    } else {
    }
    return
  }
  func.func @transform_0(%arg0: i32, %arg1: i32) -> (i32, i32, i32) {
    %c0_i32 = arith.constant 0 : i32
    %c0_i32_0 = arith.constant 0 : i32
    return %arg0, %arg1, %c0_i32 : i32, i32, i32
  }
  func.func @transform_1(%arg0: i32, %arg1: i32) -> (i32, i32) {
    %c0_i32 = arith.constant 0 : i32
    %c0_i32_0 = arith.constant 0 : i32
    %c0_i32_1 = arith.constant 0 : i32
    return %c0_i32, %c0_i32_0 : i32, i32
  }
  func.func @transform_2(%arg0: i32, %arg1: i32) -> (i32, i32) {
    %c0_i32 = arith.constant 0 : i32
    %c0_i32_0 = arith.constant 0 : i32
    %c0_i32_1 = arith.constant 0 : i32
    return %c0_i32, %c0_i32_0 : i32, i32
  }
  func.func @transform_3(%arg0: i32, %arg1: i32) -> (i32, i32) {
    %c0_i32 = arith.constant 0 : i32
    %c0_i32_0 = arith.constant 0 : i32
    return %arg0, %c0_i32 : i32, i32
  }
}

</mosaic_0001>

<llo_original>
// kernel: tpu_custom_call.1
$region0: #{tpu_custom_call.1}
  #allocation0 [shape = 'u32[]', space=smem, size = 0x4, offset = 0x4, fixed_abs, tag = 'smem constant byte address 0x4 - core index']
  #allocation1 [shape = 'u32[144,128]{1,0:T(1,128)}', space=vmem, size = 0x12000, scoped, tag = 'internal scratch']
  #allocation2 [shape = 'f32[2,32]{1,0:T(2,128)}', space=vmem, size = 0x400, scoped, tag = 'scratch operand']
  %s0 = inlined_call_operand.hbm [shape: f32[2,8,32], index: 0, kind: input, shape index: {}]
  %s1 = inlined_call_operand.hbm [shape: f32[32,32], index: 1, kind: input, shape index: {}]
  %s2 = inlined_call_operand.vmem [shape: f32[1,32], index: 2, kind: input, shape index: {}]
  %s3 = inlined_call_operand.hbm [shape: f32[2,32], index: 3, kind: output, shape index: {}]
  %s4 = sld [smem:[#allocation0]]
  $region38: #{tpu_custom_call.1} parent=0
    _
  %s6 = ssub.s32 1, %s4
  %s7 = scalar_select 0, %s6, %s4
  $region1: #{tpu_custom_call.1} parent=0
    #allocation3 [shape = 'u8[8192]{0}', space=vmem, size = 0x2000, scoped, tag = 'input window, operand 0, single buffered']
    #allocation4 [shape = 's32[1]{0}', space=sflag, size = 0x4, scoped, tag = 'scoped memory for tpu_custom_call.1']
    #allocation5 [shape = 's32[1]{0}', space=sflag, size = 0x4, scoped, tag = 'scoped memory for tpu_custom_call.1']
    #allocation6 [shape = 'u8[16384]{0}', space=vmem, size = 0x4000, scoped, tag = 'input window, operand 1, single buffered']
    #allocation7 [shape = 's32[1]{0}', space=sflag, size = 0x4, scoped, tag = 'scoped memory for tpu_custom_call.1']
    #allocation8 [shape = 'u8[1024]{0}', space=vmem, size = 0x400, scoped, tag = 'output window, operand 0, single buffered']
    %8 = vsyncpa [#allocation4], 0
    %9 = vsyncpa [#allocation7], 0
    %10 = vsyncpa [#allocation5], 0
    // Predicated region
    $region2: #{tpu_custom_call.1} parent=1 // pred_check
      _
    $region3: #{tpu_custom_call.1} parent=1 // pred_check_branch
      %12 = sbr.rel (0) target = $region5
    $region4: #{tpu_custom_call.1} parent=1 // pred_region
      %s14 = ssub.s32 256, 256
      %15 = vsyncadd [#allocation4], %s14
      %s16 = sshll.u32 [#allocation3], 4
      %s17 = int_to_ptr.vmem [resolvable:$true] %s16
      %22 = dma.hbm_to_vmem [thread:$0]  %s0, 256, %s17, [#allocation4], 128, 128, 8
    $region5: #{tpu_custom_call.1} parent=1 // pred_fallthru
      _
    // Predicated region
    $region6: #{tpu_custom_call.1} parent=1 // pred_check
      _
    $region7: #{tpu_custom_call.1} parent=1 // pred_check_branch
      %24 = sbr.rel (0) target = $region9
    $region8: #{tpu_custom_call.1} parent=1 // pred_region
      %s26 = ssub.s32 512, 512
      %27 = vsyncadd [#allocation7], %s26
      %s28 = sshll.u32 [#allocation6], 4
      %s29 = int_to_ptr.vmem [resolvable:$true] %s28
      %34 = dma.hbm_to_vmem [thread:$0]  %s1, 512, %s29, [#allocation7], 128, 128, 8
    $region9: #{tpu_custom_call.1} parent=1 // pred_fallthru
      _
    // Predicated region
    $region10: #{tpu_custom_call.1} parent=1 // pred_check
      _
    $region11: #{tpu_custom_call.1} parent=1 // pred_check_branch
      %36 = sbr.rel (0) target = $region13
    $region12: #{tpu_custom_call.1} parent=1 // pred_region
      _
    $region13: #{tpu_custom_call.1} parent=1 // pred_fallthru
      _
    // Predicated region
    $region14: #{tpu_custom_call.1} parent=1 // pred_check
      _
    $region15: #{tpu_custom_call.1} parent=1 // pred_check_branch
      %38 = sbr.rel (0) target = $region17
    $region16: #{tpu_custom_call.1} parent=1 // pred_region
      %39 = dma.done [#allocation4], 256
    $region17: #{tpu_custom_call.1} parent=1 // pred_fallthru
      _
    // Predicated region
    $region18: #{tpu_custom_call.1} parent=1 // pred_check
      _
    $region19: #{tpu_custom_call.1} parent=1 // pred_check_branch
      %41 = sbr.rel (0) target = $region21
    $region20: #{tpu_custom_call.1} parent=1 // pred_region
      %42 = dma.done [#allocation7], 512
    $region21: #{tpu_custom_call.1} parent=1 // pred_fallthru
      _
    %p43 = scmp.eq.s32.totalorder 0, 0
    // Predicated region
    $region22: #{tpu_custom_call.1} parent=1 // pred_check
      %p44 = pneg %p43
    $region23: #{tpu_custom_call.1} parent=1 // pred_check_branch
      %46 = sbr.rel (%p44) target = $region25
    $region24: #{tpu_custom_call.1} parent=1 // pred_region
      %vm47 = vcmask 254976
      %48 = vst.msk [vmem:[#allocation2] sm:$0x3] %vm47, 0.0
    $region25: #{tpu_custom_call.1} parent=1 // pred_fallthru
      _
    %v49 = vld [vmem:[#allocation3] sm:$0xff]
    %v50 = vld [vmem:[#allocation3 + $0x8] sm:$0xff]
    %v51 = vld [vmem:[#allocation2] sm:$0x3]
    %vm52 = vcmask 261120
    %v53 = vsel %vm52, %v49, 0.0
    %v54 = vrot.slane %v53, 4
    %v55 = vadd.f32 %v53, %v54
    %v56 = vrot.slane %v55, 2
    %v57 = vadd.f32 %v55, %v56
    %v58 = vrot.slane %v57, 1
    %v59 = vadd.f32 %v57, %v58
    %v60 = vsel %vm52, %v50, 0.0
    %v61 = vrot.slane %v60, 4
    %v62 = vadd.f32 %v60, %v61
    %v63 = vrot.slane %v62, 2
    %v64 = vadd.f32 %v62, %v63
    %v65 = vrot.slane %v64, 1
    %v66 = vadd.f32 %v64, %v65
    %vm69 = vcmask 1041409
    %v70 = vsel %vm69, %v66, %v59
    %v72 = vadd.f32 %v51, %v70
    %vm73 = vcmask 254976
    %74 = vst.msk [vmem:[#allocation2] sm:$0x3] %vm73, %v72
    // Predicated region
    $region26: #{tpu_custom_call.1} parent=1 // pred_check
      %p75 = pneg %p43
    $region27: #{tpu_custom_call.1} parent=1 // pred_check_branch
      %77 = sbr.rel (%p75) target = $region29
    $region28: #{tpu_custom_call.1} parent=1 // pred_region
      %v78 = vld [vmem:[#allocation2] sm:$0x3]
      %v79 = vmul.f32 %v78, 0.125
      %v80 = vld [vmem:[#allocation6] sm:$0xff]
      %v81 = vld [vmem:[#allocation6 + $0x8] sm:$0xff]
      %v82 = vld [vmem:[#allocation6 + $0x10] sm:$0xff]
      %v83 = vld [vmem:[#allocation6 + $0x18] sm:$0xff]
      %v84 = vld [vmem:[%s2] sm:$0x1]
      %v86 = vlaneseq
      %v87 = vshrl.u32 %v86, 7
      %v88 = vsub.s32 0, %v87
      %v89 = vrot.slane %v84, %v88
      %v92 = vsel %vm52, %v79, 0
      %94 = vmatprep.subr.mxu0 0.0
      %95 = vmatpush1.msra.mxu0 %v80
      %96 = vmatprep.subr.mxu0 0.0
      %97 = vmatpush1.msra.mxu0 %v81
      %98 = vmatprep.subr.mxu0 0.0
      %99 = vmatpush1.msra.mxu0 %v82
      %100 = vmatprep.subr.mxu0 0.0
      %101 = vmatpush1.msra.mxu0 %v83
      %102 = vmatprep.subr.mxu0 0.0
      %103 = vmatpush1.msra.mxu0 0.0
      %104 = vmatprep.subr.mxu0 0.0
      %105 = vmatpush1.msra.mxu0 0.0
      %106 = vmatprep.subr.mxu0 0.0
      %107 = vmatpush1.msra.mxu0 0.0
      %108 = vmatprep.subr.mxu0 0.0
      %109 = vmatpush1.msra.mxu0 0.0
      %110 = vmatprep.subr.mxu0 0.0
      %111 = vmatpush1.msra.mxu0 0.0
      %112 = vmatprep.subr.mxu0 0.0
      %113 = vmatpush1.msra.mxu0 0.0
      %114 = vmatprep.subr.mxu0 0.0
      %115 = vmatpush1.msra.mxu0 0.0
      %116 = vmatprep.subr.mxu0 0.0
      %117 = vmatpush1.msra.mxu0 0.0
      %118 = vmatprep.subr.mxu0 0.0
      %119 = vmatpush1.msra.mxu0 0.0
      %120 = vmatprep.subr.mxu0 0.0
      %121 = vmatpush1.msra.mxu0 0.0
      %122 = vmatprep.subr.mxu0 0.0
      %123 = vmatpush1.msra.mxu0 0.0
      %124 = vmatprep.subr.mxu0 0.0
      %125 = vmatpush1.msra.mxu0 0.0
      %126 = vmatprep.subr.mxu0 0.0
      %127 = vmatpush1.msra.mxu0 0.0
      %128 = vmatprep.subr.mxu0 0.0
      %129 = vmatpush1.msra.mxu0 0.0
      %130 = vmatprep.subr.mxu0 0.0
      %131 = vmatpush1.msra.mxu0 0.0
      %132 = vmatprep.subr.mxu0 0.0
      %133 = vmatpush1.msra.mxu0 0.0
      %134 = vmatprep.subr.mxu0 0.0
      %135 = vmatpush1.msra.mxu0 0.0
      %136 = vmatprep.subr.mxu0 0.0
      %137 = vmatpush1.msra.mxu0 0.0
      %138 = vmatprep.subr.mxu0 0.0
      %139 = vmatpush1.msra.mxu0 0.0
      %140 = vmatprep.subr.mxu0 0.0
      %141 = vmatpush1.msra.mxu0 0.0
      %142 = vmatprep.subr.mxu0 0.0
      %143 = vmatpush1.msra.mxu0 0.0
      %144 = vmatprep.subr.mxu0 0.0
      %145 = vmatpush1.msra.mxu0 0.0
      %146 = vmatprep.subr.mxu0 0.0
      %147 = vmatpush1.msra.mxu0 0.0
      %148 = vmatprep.subr.mxu0 0.0
      %149 = vmatpush1.msra.mxu0 0.0
      %150 = vmatprep.subr.mxu0 0.0
      %151 = vmatpush1.msra.mxu0 0.0
      %152 = vmatprep.subr.mxu0 0.0
      %153 = vmatpush1.msra.mxu0 0.0
      %154 = vmatprep.subr.mxu0 0.0
      %155 = vmatpush1.msra.mxu0 0.0
      %156 = vmatprep.subr.mxu0 0.0
      %157 = vmatpush1.msra.mxu0 0.0
      %158 = vmatprep.mubr.f32.mxu0 0.0
      %159 = vmatmul.mubr.f32.gmra.mrb[0].mxu0 %v92
      %v160 = vpop.f32.mrb[0].mxu0
      %v161 = vadd.f32 %v89, %v160
      %v162 = vpop.f32.mrb[0].mxu0
      %163 = vdwg.mxu0
      %v164 = vtanh.pop %v161
      %165 = vst.msk [vmem:[#allocation8] sm:$0x3] %vm73, %v164
    $region29: #{tpu_custom_call.1} parent=1 // pred_fallthru
      _
    // Predicated region
    $region30: #{tpu_custom_call.1} parent=1 // pred_check
      _
    $region31: #{tpu_custom_call.1} parent=1 // pred_check_branch
      %167 = sbr.rel (0) target = $region33
    $region32: #{tpu_custom_call.1} parent=1 // pred_region
      %s169 = ssub.s32 32, 32
      %170 = vsyncadd [#allocation5], %s169
      %s172 = sshll.u32 [#allocation8], 4
      %s173 = int_to_ptr.vmem [resolvable:$true] %s172
      %175 = dma.vmem_to_hbm [thread:$0]  %s173, 32, %s3, [#allocation5]
    $region33: #{tpu_custom_call.1} parent=1 // pred_fallthru
      _
    // Predicated region
    $region34: #{tpu_custom_call.1} parent=1 // pred_check
      _
    $region35: #{tpu_custom_call.1} parent=1 // pred_check_branch
      %177 = sbr.rel (0) target = $region37
    $region36: #{tpu_custom_call.1} parent=1 // pred_region
      %178 = dma.done [#allocation5], 32
    $region37: #{tpu_custom_call.1} parent=1 // pred_fallthru
      _
    %179 = vsyncpa [#allocation4], 1
    %180 = vsyncpa [#allocation7], 1
    %181 = vsyncpa [#allocation5], 1

// kernel: tpu_custom_call.1
$region0: #{tpu_custom_call.1}
  #allocation0 [shape = 'u32[]', space=smem, size = 0x4, offset = 0x4, fixed_abs, tag = 'smem constant byte address 0x4 - core index']
  #allocation1 [shape = 'u32[144,128]{1,0:T(1,128)}', space=vmem, size = 0x12000, scoped, tag = 'internal scratch']
  #allocation2 [shape = 'f32[2,32]{1,0:T(2,128)}', space=vmem, size = 0x400, scoped, tag = 'scratch operand']
  %s0 = inlined_call_operand.hbm [shape: f32[2,8,32], index: 0, kind: input, shape index: {}]
  %s1 = inlined_call_operand.hbm [shape: f32[32,32], index: 1, kind: input, shape index: {}]
  %s2 = inlined_call_operand.vmem [shape: f32[1,32], index: 2, kind: input, shape index: {}]
  %s3 = inlined_call_operand.hbm [shape: f32[2,32], index: 3, kind: output, shape index: {}]
  %s4 = sld [smem:[#allocation0]]
  $region38: #{tpu_custom_call.1} parent=0
    _
  %s6 = ssub.s32 1, %s4
  %s7 = scalar_select 0, %s6, %s4
  $region1: #{tpu_custom_call.1} parent=0
    #allocation3 [shape = 'u8[8192]{0}', space=vmem, size = 0x2000, scoped, tag = 'input window, operand 0, single buffered']
    #allocation4 [shape = 's32[1]{0}', space=sflag, size = 0x4, scoped, tag = 'scoped memory for tpu_custom_call.1']
    #allocation5 [shape = 's32[1]{0}', space=sflag, size = 0x4, scoped, tag = 'scoped memory for tpu_custom_call.1']
    #allocation6 [shape = 'u8[16384]{0}', space=vmem, size = 0x4000, scoped, tag = 'input window, operand 1, single buffered']
    #allocation7 [shape = 's32[1]{0}', space=sflag, size = 0x4, scoped, tag = 'scoped memory for tpu_custom_call.1']
    #allocation8 [shape = 'u8[1024]{0}', space=vmem, size = 0x400, scoped, tag = 'output window, operand 0, single buffered']
    %8 = vsyncpa [#allocation4], 0
    %9 = vsyncpa [#allocation7], 0
    %10 = vsyncpa [#allocation5], 0
    // Predicated region
    $region2: #{tpu_custom_call.1} parent=1 // pred_check
      _
    $region3: #{tpu_custom_call.1} parent=1 // pred_check_branch
      %12 = sbr.rel (0) target = $region5
    $region4: #{tpu_custom_call.1} parent=1 // pred_region
      %s14 = ssub.s32 256, 256
      %15 = vsyncadd [#allocation4], %s14
      %s16 = sshll.u32 [#allocation3], 4
      %s17 = int_to_ptr.vmem [resolvable:$true] %s16
      %22 = dma.hbm_to_vmem [thread:$0]  %s0, 256, %s17, [#allocation4], 128, 128, 8
    $region5: #{tpu_custom_call.1} parent=1 // pred_fallthru
      _
    // Predicated region
    $region6: #{tpu_custom_call.1} parent=1 // pred_check
      _
    $region7: #{tpu_custom_call.1} parent=1 // pred_check_branch
      %24 = sbr.rel (0) target = $region9
    $region8: #{tpu_custom_call.1} parent=1 // pred_region
      %s26 = ssub.s32 512, 512
      %27 = vsyncadd [#allocation7], %s26
      %s28 = sshll.u32 [#allocation6], 4
      %s29 = int_to_ptr.vmem [resolvable:$true] %s28
      %34 = dma.hbm_to_vmem [thread:$0]  %s1, 512, %s29, [#allocation7], 128, 128, 8
    $region9: #{tpu_custom_call.1} parent=1 // pred_fallthru
      _
    // Predicated region
    $region10: #{tpu_custom_call.1} parent=1 // pred_check
      _
    $region11: #{tpu_custom_call.1} parent=1 // pred_check_branch
      %36 = sbr.rel (0) target = $region13
    $region12: #{tpu_custom_call.1} parent=1 // pred_region
      _
    $region13: #{tpu_custom_call.1} parent=1 // pred_fallthru
      _
    // Predicated region
    $region14: #{tpu_custom_call.1} parent=1 // pred_check
      _
    $region15: #{tpu_custom_call.1} parent=1 // pred_check_branch
      %38 = sbr.rel (0) target = $region17
    $region16: #{tpu_custom_call.1} parent=1 // pred_region
      %39 = dma.done [#allocation4], 256
    $region17: #{tpu_custom_call.1} parent=1 // pred_fallthru
      _
    // Predicated region
    $region18: #{tpu_custom_call.1} parent=1 // pred_check
      _
    $region19: #{tpu_custom_call.1} parent=1 // pred_check_branch
      %41 = sbr.rel (0) target = $region21
    $region20: #{tpu_custom_call.1} parent=1 // pred_region
      %42 = dma.done [#allocation7], 512
    $region21: #{tpu_custom_call.1} parent=1 // pred_fallthru
      _
    %p43 = scmp.eq.s32.totalorder 0, 0
    // Predicated region
    $region22: #{tpu_custom_call.1} parent=1 // pred_check
      %p44 = pneg %p43
    $region23: #{tpu_custom_call.1} parent=1 // pred_check_branch
      %46 = sbr.rel (%p44) target = $region25
    $region24: #{tpu_custom_call.1} parent=1 // pred_region
      %vm47 = vcmask 254976
      %48 = vst.msk [vmem:[#allocation2] sm:$0x3] %vm47, 0.0
    $region25: #{tpu_custom_call.1} parent=1 // pred_fallthru
      _
    %v49 = vld [vmem:[#allocation3] sm:$0xff]
    %v50 = vld [vmem:[#allocation3 + $0x8] sm:$0xff]
    %v51 = vld [vmem:[#allocation2] sm:$0x3]
    %vm52 = vcmask 261120
    %v53 = vsel %vm52, %v49, 0.0
    %v54 = vrot.slane %v53, 4
    %v55 = vadd.f32 %v53, %v54
    %v56 = vrot.slane %v55, 2
    %v57 = vadd.f32 %v55, %v56
    %v58 = vrot.slane %v57, 1
    %v59 = vadd.f32 %v57, %v58
    %v60 = vsel %vm52, %v50, 0.0
    %v61 = vrot.slane %v60, 4
    %v62 = vadd.f32 %v60, %v61
    %v63 = vrot.slane %v62, 2
    %v64 = vadd.f32 %v62, %v63
    %v65 = vrot.slane %v64, 1
    %v66 = vadd.f32 %v64, %v65
    %vm69 = vcmask 1041409
    %v70 = vsel %vm69, %v66, %v59
    %v72 = vadd.f32 %v51, %v70
    %vm73 = vcmask 254976
    %74 = vst.msk [vmem:[#allocation2] sm:$0x3] %vm73, %v72
    // Predicated region
    $region26: #{tpu_custom_call.1} parent=1 // pred_check
      %p75 = pneg %p43
    $region27: #{tpu_custom_call.1} parent=1 // pred_check_branch
      %77 = sbr.rel (%p75) target = $region29
    $region28: #{tpu_custom_call.1} parent=1 // pred_region
      %v78 = vld [vmem:[#allocation2] sm:$0x3]
      %v79 = vmul.f32 %v78, 0.125
      %v80 = vld [vmem:[#allocation6] sm:$0xff]
      %v81 = vld [vmem:[#allocation6 + $0x8] sm:$0xff]
      %v82 = vld [vmem:[#allocation6 + $0x10] sm:$0xff]
      %v83 = vld [vmem:[#allocation6 + $0x18] sm:$0xff]
      %v84 = vld [vmem:[%s2] sm:$0x1]
      %v86 = vlaneseq
      %v87 = vshrl.u32 %v86, 7
      %v88 = vsub.s32 0, %v87
      %v89 = vrot.slane %v84, %v88
      %v92 = vsel %vm52, %v79, 0
      %94 = vmatprep.subr.mxu0 0.0
      %95 = vmatpush1.msra.mxu0 %v80
      %96 = vmatprep.subr.mxu0 0.0
      %97 = vmatpush1.msra.mxu0 %v81
      %98 = vmatprep.subr.mxu0 0.0
      %99 = vmatpush1.msra.mxu0 %v82
      %100 = vmatprep.subr.mxu0 0.0
      %101 = vmatpush1.msra.mxu0 %v83
      %102 = vmatprep.subr.mxu0 0.0
      %103 = vmatpush1.msra.mxu0 0.0
      %104 = vmatprep.subr.mxu0 0.0
      %105 = vmatpush1.msra.mxu0 0.0
      %106 = vmatprep.subr.mxu0 0.0
      %107 = vmatpush1.msra.mxu0 0.0
      %108 = vmatprep.subr.mxu0 0.0
      %109 = vmatpush1.msra.mxu0 0.0
      %110 = vmatprep.subr.mxu0 0.0
      %111 = vmatpush1.msra.mxu0 0.0
      %112 = vmatprep.subr.mxu0 0.0
      %113 = vmatpush1.msra.mxu0 0.0
      %114 = vmatprep.subr.mxu0 0.0
      %115 = vmatpush1.msra.mxu0 0.0
      %116 = vmatprep.subr.mxu0 0.0
      %117 = vmatpush1.msra.mxu0 0.0
      %118 = vmatprep.subr.mxu0 0.0
      %119 = vmatpush1.msra.mxu0 0.0
      %120 = vmatprep.subr.mxu0 0.0
      %121 = vmatpush1.msra.mxu0 0.0
      %122 = vmatprep.subr.mxu0 0.0
      %123 = vmatpush1.msra.mxu0 0.0
      %124 = vmatprep.subr.mxu0 0.0
      %125 = vmatpush1.msra.mxu0 0.0
      %126 = vmatprep.subr.mxu0 0.0
      %127 = vmatpush1.msra.mxu0 0.0
      %128 = vmatprep.subr.mxu0 0.0
      %129 = vmatpush1.msra.mxu0 0.0
      %130 = vmatprep.subr.mxu0 0.0
      %131 = vmatpush1.msra.mxu0 0.0
      %132 = vmatprep.subr.mxu0 0.0
      %133 = vmatpush1.msra.mxu0 0.0
      %134 = vmatprep.subr.mxu0 0.0
      %135 = vmatpush1.msra.mxu0 0.0
      %136 = vmatprep.subr.mxu0 0.0
      %137 = vmatpush1.msra.mxu0 0.0
      %138 = vmatprep.subr.mxu0 0.0
      %139 = vmatpush1.msra.mxu0 0.0
      %140 = vmatprep.subr.mxu0 0.0
      %141 = vmatpush1.msra.mxu0 0.0
      %142 = vmatprep.subr.mxu0 0.0
      %143 = vmatpush1.msra.mxu0 0.0
      %144 = vmatprep.subr.mxu0 0.0
      %145 = vmatpush1.msra.mxu0 0.0
      %146 = vmatprep.subr.mxu0 0.0
      %147 = vmatpush1.msra.mxu0 0.0
      %148 = vmatprep.subr.mxu0 0.0
      %149 = vmatpush1.msra.mxu0 0.0
      %150 = vmatprep.subr.mxu0 0.0
      %151 = vmatpush1.msra.mxu0 0.0
      %152 = vmatprep.subr.mxu0 0.0
      %153 = vmatpush1.msra.mxu0 0.0
      %154 = vmatprep.subr.mxu0 0.0
      %155 = vmatpush1.msra.mxu0 0.0
      %156 = vmatprep.subr.mxu0 0.0
      %157 = vmatpush1.msra.mxu0 0.0
      %158 = vmatprep.mubr.f32.mxu0 0.0
      %159 = vmatmul.mubr.f32.gmra.mrb[0].mxu0 %v92
      %v160 = vpop.f32.mrb[0].mxu0
      %v161 = vadd.f32 %v89, %v160
      %v162 = vpop.f32.mrb[0].mxu0
      %163 = vdwg.mxu0
      %v164 = vtanh.pop %v161
      %165 = vst.msk [vmem:[#allocation8] sm:$0x3] %vm73, %v164
    $region29: #{tpu_custom_call.1} parent=1 // pred_fallthru
      _
    // Predicated region
    $region30: #{tpu_custom_call.1} parent=1 // pred_check
      _
    $region31: #{tpu_custom_call.1} parent=1 // pred_check_branch
      %167 = sbr.rel (0) target = $region33
    $region32: #{tpu_custom_call.1} parent=1 // pred_region
      %s169 = ssub.s32 32, 32
      %170 = vsyncadd [#allocation5], %s169
      %s172 = sshll.u32 [#allocation8], 4
      %s173 = int_to_ptr.vmem [resolvable:$true] %s172
      %175 = dma.vmem_to_hbm [thread:$0]  %s173, 32, %s3, [#allocation5]
    $region33: #{tpu_custom_call.1} parent=1 // pred_fallthru
      _
    // Predicated region
    $region34: #{tpu_custom_call.1} parent=1 // pred_check
      _
    $region35: #{tpu_custom_call.1} parent=1 // pred_check_branch
      %177 = sbr.rel (0) target = $region37
    $region36: #{tpu_custom_call.1} parent=1 // pred_region
      %178 = dma.done [#allocation5], 32
    $region37: #{tpu_custom_call.1} parent=1 // pred_fallthru
      _
    %179 = vsyncpa [#allocation4], 1
    %180 = vsyncpa [#allocation7], 1
    %181 = vsyncpa [#allocation5], 1

</llo_original>
